<compile_context>
chip_gen: v7x
topology: tpu7x:2x2x1
jax: 0.10.0
libtpu: 0.0.40
codegen_flags: <defaults>
</compile_context>

<pallas_src>
import math
from functools import partial

import jax
import jax.numpy as jnp
from jax import lax
from jax.experimental import pallas as pl
from jax.experimental.pallas import tpu as pltpu


_SQRT_HALF = 1.0 / math.sqrt(2.0)


def _exact_gelu(x):
    # PyTorch F.gelu default ("none"): 0.5 * x * (1 + erf(x / sqrt(2)))
    return 0.5 * x * (1.0 + lax.erf(x * _SQRT_HALF))


# ---------------------------------------------------------------------------
# Kernels
# ---------------------------------------------------------------------------

def _ff_kernel_resident(x_ref, w1a_ref, b1a_ref, w1b_ref, b1b_ref, w2_ref,
                        b2_ref, o_ref):
    """All weights VMEM-resident: 1-D grid over row tiles, no accumulator."""
    x = x_ref[...]  # keep operand dtype (bf16 hits native MXU), f32 accumulate
    a = jnp.dot(x, w1a_ref[...], preferred_element_type=jnp.float32)
    a = a + b1a_ref[...].astype(jnp.float32)
    g = jnp.dot(x, w1b_ref[...], preferred_element_type=jnp.float32)
    g = g + b1b_ref[...].astype(jnp.float32)
    z = a * _exact_gelu(g)  # GEGLU, f32 elementwise
    # Dropout(p=0.0) is identity -> skipped.
    # TODO(synk): Dropout with p > 0 (training-mode random deactivation) is
    # not implemented in the kernel.
    y = jnp.dot(z.astype(w2_ref.dtype), w2_ref[...],
                preferred_element_type=jnp.float32)
    o_ref[...] = (y + b2_ref[...].astype(jnp.float32)).astype(o_ref.dtype)


def _ff_kernel_streamed(x_ref, w1a_ref, b1a_ref, w1b_ref, b1b_ref, w2_ref,
                        b2_ref, o_ref, acc_ref):
    """Hidden dim streamed on grid axis 1 with an f32 VMEM accumulator."""
    h = pl.program_id(1)
    x = x_ref[...]
    a = jnp.dot(x, w1a_ref[...], preferred_element_type=jnp.float32)
    a = a + b1a_ref[...].astype(jnp.float32)
    g = jnp.dot(x, w1b_ref[...], preferred_element_type=jnp.float32)
    g = g + b1b_ref[...].astype(jnp.float32)
    z = (a * _exact_gelu(g)).astype(w2_ref.dtype)
    part = jnp.dot(z, w2_ref[...], preferred_element_type=jnp.float32)

    # Direct-store on the first hidden step (saves zero-init + RMW pass).
    @pl.when(h == 0)
    def _first():
        acc_ref[...] = part

    @pl.when(h != 0)
    def _accum():
        acc_ref[...] += part

    @pl.when(h == pl.num_programs(1) - 1)
    def _finalize():
        o_ref[...] = (acc_ref[...]
                      + b2_ref[...].astype(jnp.float32)).astype(o_ref.dtype)


# ---------------------------------------------------------------------------
# Tiling / VMEM budgeting helpers
# ---------------------------------------------------------------------------

def _round_up(n, m):
    return ((n + m - 1) // m) * m


def _physical_vmem_bytes():
    try:
        info = pltpu.get_tpu_info()
        v = getattr(info, "vmem_capacity_bytes", None)
        if v:
            return int(v)
    except Exception:
        pass
    return 64 << 20  # conservative: v7x has the smallest per-core VMEM


def _pick_hidden_tile(hidden, requested):
    """Largest multiple of 128 that divides `hidden` and is <= requested;
    falls back to the full hidden dim (always a legal full-extent block)."""
    if hidden <= requested:
        return hidden
    req = max(128, (requested // 128) * 128)
    for ht in range(req, 127, -128):
        if hidden % ht == 0:
            return ht
    return hidden


def _halvings(v, floor):
    out = [v]
    while out[-1] > floor:
        nxt = max(floor, _round_up(out[-1] // 2, 8))
        if nxt >= out[-1]:
            break
        out.append(nxt)
    return out


def _th_candidates(hidden, target):
    cands = [_pick_hidden_tile(hidden, target)]
    while cands[-1] > 128:
        nxt = _pick_hidden_tile(hidden, cands[-1] - 128)
        if nxt >= cands[-1]:
            break
        cands.append(nxt)
    return cands


def _select_config(rows, dim, dim_p, hidden, itemsize, budget,
                   row_tile, hidden_tile, force_streamed):
    """Pick (row_tile, hidden_tile, resident, est_vmem_bytes)."""

    def footprint(tr, th, resident):
        # double-buffered pipelined operands + output (+ f32 acc if streamed)
        b = 2 * itemsize * (tr * dim            # x tile
                            + 2 * dim * th      # W1a + W1b tiles
                            + th * dim_p        # W2 tile
                            + 2 * th + dim_p    # biases
                            + tr * dim_p)       # out tile
        if not resident:
            b += tr * dim_p * 4                 # f32 accumulator scratch
        return b

    def initial_tr(target):
        tr = max(8, _round_up(min(target, rows), 8))
        # Keep >= 2 row tiles when there is enough work so the "parallel"
        # row axis feeds both TensorCores on v7x (megacore on others).
        if rows >= 256:
            tr = min(tr, _round_up(-(-rows // 2), 8))
        return tr

    # --- Path 1: all weights VMEM-resident (hidden grid axis dropped) -------
    if not force_streamed:
        for tr in _halvings(initial_tr(row_tile if row_tile else 512), 128):
            fp = footprint(tr, hidden, True)
            if fp <= budget:
                return tr, hidden, True, fp

    # --- Path 2: stream the hidden dim with an f32 accumulator --------------
    tr_cands = _halvings(initial_tr(row_tile if row_tile else 1024), 128)
    th_cands = _th_candidates(hidden, hidden_tile if hidden_tile else 512)
    for tr in tr_cands:          # prefer the largest row tile (intensity ~TR)
        for th in th_cands:      # then the largest hidden tile that fits
            fp = footprint(tr, th, False)
            if fp <= budget:
                return tr, th, False, fp
    tr, th = tr_cands[-1], th_cands[-1]
    return tr, th, False, footprint(tr, th, False)


# ---------------------------------------------------------------------------
# Wrapper
# ---------------------------------------------------------------------------

@partial(jax.jit, static_argnames=("row_tile", "hidden_tile", "force_streamed"))
def feedforward(x, w1, b1, w2, b2, *, row_tile=None, hidden_tile=None,
                force_streamed=False):
    """x: (batch, seq, dim) -> (batch, seq, dim).

    w1: (dim, 2*hidden), b1: (2*hidden,), w2: (hidden, dim), b2: (dim,).
    """
    batch, seq, dim = x.shape
    hidden = w1.shape[1] // 2

    # Split the fused GEGLU projection into its halves outside the kernel
    # (matches torch.chunk(2, dim=-1): first half = values, second = gates).
    w1a = w1[:, :hidden]
    w1b = w1[:, hidden:]
    b1a = b1[:hidden].reshape(1, hidden)
    b1b = b1[hidden:].reshape(1, hidden)

    # Lane-dense output stores: pad the output feature dim to a multiple of
    # 128 (only W2 cols / b2 are padded; x and W1 are untouched).
    dim_p = _round_up(dim, 128)
    if dim_p != dim:
        w2_p = jnp.pad(w2, ((0, 0), (0, dim_p - dim)))
        b2_p = jnp.pad(b2, (0, dim_p - dim)).reshape(1, dim_p)
    else:
        w2_p = w2
        b2_p = b2.reshape(1, dim_p)

    rows = batch * seq
    x2d = x.reshape(rows, dim)

    itemsize = max(jnp.dtype(x.dtype).itemsize, jnp.dtype(w1.dtype).itemsize)
    phys_vmem = _physical_vmem_bytes()
    budget = int(phys_vmem * 0.70)
    tr, th, resident, est = _select_config(
        rows, dim, dim_p, hidden, itemsize, budget,
        row_tile, hidden_tile, force_streamed)
    vmem_limit = max(min(est + (4 << 20), int(phys_vmem * 0.9)), 32 << 20)

    n_row_tiles = -(-rows // tr)  # cdiv: no jnp.pad / output-slice round trip

    if resident:
        grid = (n_row_tiles,)
        in_specs = [
            pl.BlockSpec((tr, dim), lambda i: (i, 0)),        # x row tile
            pl.BlockSpec((dim, hidden), lambda i: (0, 0)),    # W1a (values)
            pl.BlockSpec((1, hidden), lambda i: (0, 0)),      # b1a
            pl.BlockSpec((dim, hidden), lambda i: (0, 0)),    # W1b (gates)
            pl.BlockSpec((1, hidden), lambda i: (0, 0)),      # b1b
            pl.BlockSpec((hidden, dim_p), lambda i: (0, 0)),  # W2
            pl.BlockSpec((1, dim_p), lambda i: (0, 0)),       # b2
        ]
        out_spec = pl.BlockSpec((tr, dim_p), lambda i: (i, 0))
        scratch = ()
        kernel = _ff_kernel_resident
        dim_sem = ("parallel",)
    else:
        grid = (n_row_tiles, hidden // th)
        in_specs = [
            pl.BlockSpec((tr, dim), lambda i, h: (i, 0)),     # x row tile
            pl.BlockSpec((dim, th), lambda i, h: (0, h)),     # W1a tile
            pl.BlockSpec((1, th), lambda i, h: (0, h)),       # b1a tile
            pl.BlockSpec((dim, th), lambda i, h: (0, h)),     # W1b tile
            pl.BlockSpec((1, th), lambda i, h: (0, h)),       # b1b tile
            pl.BlockSpec((th, dim_p), lambda i, h: (h, 0)),   # W2 tile
            pl.BlockSpec((1, dim_p), lambda i, h: (0, 0)),    # b2
        ]
        out_spec = pl.BlockSpec((tr, dim_p), lambda i, h: (i, 0))
        scratch = (pltpu.VMEM((tr, dim_p), jnp.float32),)
        kernel = _ff_kernel_streamed
        dim_sem = ("parallel", "arbitrary")

    out = pl.pallas_call(
        kernel,
        out_shape=jax.ShapeDtypeStruct((rows, dim_p), x.dtype),
        grid_spec=pltpu.PrefetchScalarGridSpec(
            num_scalar_prefetch=0,
            grid=grid,
            in_specs=in_specs,
            out_specs=out_spec,
            scratch_shapes=scratch,
        ),
        compiler_params=pltpu.CompilerParams(
            dimension_semantics=dim_sem,
            vmem_limit_bytes=int(vmem_limit),
        ),
    )(x2d, w1a, b1a, w1b, b1b, w2_p, b2_p)

    if dim_p != dim:
        out = out[:, :dim]
    return out.reshape(batch, seq, dim)


# ---------------------------------------------------------------------------
# Reference / params
# ---------------------------------------------------------------------------

def init_params(key, dim, mult=4, dtype=jnp.float32):
    """nn.Linear default init: U(-1/sqrt(fan_in), 1/sqrt(fan_in))."""
    hidden = dim * mult
    k1, k2, k3, k4 = jax.random.split(key, 4)
    bound1 = 1.0 / math.sqrt(dim)
    w1 = jax.random.uniform(k1, (dim, hidden * 2), dtype, -bound1, bound1)
    b1 = jax.random.uniform(k2, (hidden * 2,), dtype, -bound1, bound1)
    bound2 = 1.0 / math.sqrt(hidden)
    w2 = jax.random.uniform(k3, (hidden, dim), dtype, -bound2, bound2)
    b2 = jax.random.uniform(k4, (dim,), dtype, -bound2, bound2)
    return w1, b1, w2, b2


def feedforward_ref(x, w1, b1, w2, b2):
    """Pure-JAX reference for correctness check."""
    h = jnp.einsum("bsd,dh->bsh", x, w1) + b1
    hidden = h.shape[-1] // 2
    a, g = h[..., :hidden], h[..., hidden:]
    z = a * _exact_gelu(g)
    return jnp.einsum("bsh,hd->bsd", z, w2) + b2


if __name__ == "__main__":
    key = jax.random.PRNGKey(0)
    k_x, k_p, k_x2, k_p2 = jax.random.split(key, 4)

    # --- Test 1: TabTransformer-typical small dim (dim < 128 -> padded lanes,
    #             weights-resident path).
    batch, seq, dim, mult = 2, 8, 32, 4
    x = jax.random.normal(k_x, (batch, seq, dim), jnp.float32)
    w1, b1, w2, b2 = init_params(k_p, dim, mult)

    out = jax.block_until_ready(feedforward(x, w1, b1, w2, b2))
    ref = feedforward_ref(x, w1, b1, w2, b2)
    assert out.shape == (batch, seq, dim)
    assert jnp.allclose(out, ref, atol=2e-4, rtol=2e-4), \
        "f32 resident-path mismatch vs reference"

    # bf16 fast path (native MXU matmuls, f32 accumulation) - loose tolerance.
    out_bf16 = jax.block_until_ready(feedforward(
        x.astype(jnp.bfloat16),
        w1.astype(jnp.bfloat16), b1.astype(jnp.bfloat16),
        w2.astype(jnp.bfloat16), b2.astype(jnp.bfloat16)))
    assert out_bf16.shape == (batch, seq, dim)
    assert jnp.allclose(out_bf16.astype(jnp.float32), ref, atol=1e-1, rtol=1e-1), \
        "bf16 mismatch vs reference"

    # --- Test 2: ragged row count (rows % row_tile != 0) exercising the
    #             pad-free cdiv grid with a masked boundary row block.
    x_r = jax.random.normal(k_x2, (3, 5, dim), jnp.float32)
    out_r = jax.block_until_ready(feedforward(x_r, w1, b1, w2, b2))
    ref_r = feedforward_ref(x_r, w1, b1, w2, b2)
    assert jnp.allclose(out_r, ref_r, atol=2e-4, rtol=2e-4), \
        "ragged-rows mismatch vs reference"

    # --- Test 3: hidden-streaming fallback path (f32 accumulator, multi-step
    #             reduction over the hidden axis).
    dim3 = 128
    x3 = jax.random.normal(k_x2, (batch, seq, dim3), jnp.float32)
    w1_3, b1_3, w2_3, b2_3 = init_params(k_p2, dim3, mult)
    out_s = jax.block_until_ready(feedforward(
        x3, w1_3, b1_3, w2_3, b2_3, hidden_tile=128, force_streamed=True))
    ref_s = feedforward_ref(x3, w1_3, b1_3, w2_3, b2_3)
    assert out_s.shape == (batch, seq, dim3)
    assert jnp.allclose(out_s, ref_s, atol=5e-4, rtol=5e-4), \
        "streamed-path mismatch vs reference"

    print("KERNEL_OK")
</pallas_src>

<mosaic_0001>
module attributes {stable_mosaic.version = 11 : i64} {
  func.func @_ff_kernel_resident(%arg0: i32, %arg1: memref<16x32xf32, #tpu.memory_space<vmem>>, %arg2: memref<32x128xf32, #tpu.memory_space<vmem>>, %arg3: memref<1x128xf32, #tpu.memory_space<vmem>>, %arg4: memref<32x128xf32, #tpu.memory_space<vmem>>, %arg5: memref<1x128xf32, #tpu.memory_space<vmem>>, %arg6: memref<128x128xf32, #tpu.memory_space<vmem>>, %arg7: memref<1x128xf32, #tpu.memory_space<vmem>>, %arg8: memref<16x128xf32, #tpu.memory_space<vmem>>) attributes {dimension_semantics = [#tpu.dimension_semantics<parallel>], iteration_bounds = array<i64: 1>, scalar_prefetch = 0 : i64, scratch_operands = 0 : i64, tpu.core_type = #tpu.core_type<tc>, window_params = [{transform_indices = @transform_0, window_bounds = array<i64: 16, 32>}, {pipeline_mode = #tpu.pipeline_mode<synchronous>, transform_indices = @transform_1, window_bounds = array<i64: 32, 128>}, {pipeline_mode = #tpu.pipeline_mode<synchronous>, transform_indices = @transform_2, window_bounds = array<i64: 1, 128>}, {pipeline_mode = #tpu.pipeline_mode<synchronous>, transform_indices = @transform_3, window_bounds = array<i64: 32, 128>}, {pipeline_mode = #tpu.pipeline_mode<synchronous>, transform_indices = @transform_4, window_bounds = array<i64: 1, 128>}, {pipeline_mode = #tpu.pipeline_mode<synchronous>, transform_indices = @transform_5, window_bounds = array<i64: 128, 128>}, {pipeline_mode = #tpu.pipeline_mode<synchronous>, transform_indices = @transform_6, window_bounds = array<i64: 1, 128>}, {transform_indices = @transform_7, window_bounds = array<i64: 16, 128>}]} {
    %c0 = arith.constant 0 : index
    %c0_0 = arith.constant 0 : index
    %0 = vector.load %arg1[%c0, %c0_0] : memref<16x32xf32, #tpu.memory_space<vmem>>, vector<16x32xf32>
    %c0_1 = arith.constant 0 : index
    %c0_2 = arith.constant 0 : index
    %1 = vector.load %arg2[%c0_1, %c0_2] : memref<32x128xf32, #tpu.memory_space<vmem>>, vector<32x128xf32>
    %cst = arith.constant dense<0.000000e+00> : vector<16x128xf32>
    %2 = tpu.matmul %0, %1, %cst {dimension_numbers = #tpu.dot_dimension_numbers<[1], [0], [0], [1], [0, 0, 1, 1], [], []>} : vector<16x32xf32>, vector<32x128xf32>, vector<16x128xf32> -> vector<16x128xf32>
    %c0_3 = arith.constant 0 : index
    %c0_4 = arith.constant 0 : index
    %3 = vector.load %arg3[%c0_3, %c0_4] : memref<1x128xf32, #tpu.memory_space<vmem>>, vector<1x128xf32>
    %4 = vector.broadcast %3 : vector<1x128xf32> to vector<16x128xf32>
    %5 = arith.addf %2, %4 : vector<16x128xf32>
    %c0_5 = arith.constant 0 : index
    %c0_6 = arith.constant 0 : index
    %6 = vector.load %arg4[%c0_5, %c0_6] : memref<32x128xf32, #tpu.memory_space<vmem>>, vector<32x128xf32>
    %cst_7 = arith.constant dense<0.000000e+00> : vector<16x128xf32>
    %7 = tpu.matmul %0, %6, %cst_7 {dimension_numbers = #tpu.dot_dimension_numbers<[1], [0], [0], [1], [0, 0, 1, 1], [], []>} : vector<16x32xf32>, vector<32x128xf32>, vector<16x128xf32> -> vector<16x128xf32>
    %c0_8 = arith.constant 0 : index
    %c0_9 = arith.constant 0 : index
    %8 = vector.load %arg5[%c0_8, %c0_9] : memref<1x128xf32, #tpu.memory_space<vmem>>, vector<1x128xf32>
    %9 = vector.broadcast %8 : vector<1x128xf32> to vector<16x128xf32>
    %10 = arith.addf %7, %9 : vector<16x128xf32>
    %cst_10 = arith.constant 5.000000e-01 : f32
    %11 = vector.broadcast %cst_10 : f32 to vector<16x128xf32>
    %12 = arith.mulf %11, %10 : vector<16x128xf32>
    %cst_11 = arith.constant 0.707106769 : f32
    %13 = vector.broadcast %cst_11 : f32 to vector<16x128xf32>
    %14 = arith.mulf %10, %13 : vector<16x128xf32>
    %15 = math.erf %14 : vector<16x128xf32>
    %cst_12 = arith.constant 1.000000e+00 : f32
    %16 = vector.broadcast %cst_12 : f32 to vector<16x128xf32>
    %17 = arith.addf %16, %15 : vector<16x128xf32>
    %18 = arith.mulf %12, %17 : vector<16x128xf32>
    %19 = arith.mulf %5, %18 : vector<16x128xf32>
    %c0_13 = arith.constant 0 : index
    %c0_14 = arith.constant 0 : index
    %20 = vector.load %arg6[%c0_13, %c0_14] : memref<128x128xf32, #tpu.memory_space<vmem>>, vector<128x128xf32>
    %cst_15 = arith.constant dense<0.000000e+00> : vector<16x128xf32>
    %21 = tpu.matmul %19, %20, %cst_15 {dimension_numbers = #tpu.dot_dimension_numbers<[1], [0], [0], [1], [0, 0, 1, 1], [], []>} : vector<16x128xf32>, vector<128x128xf32>, vector<16x128xf32> -> vector<16x128xf32>
    %c0_16 = arith.constant 0 : index
    %c0_17 = arith.constant 0 : index
    %22 = vector.load %arg7[%c0_16, %c0_17] : memref<1x128xf32, #tpu.memory_space<vmem>>, vector<1x128xf32>
    %23 = vector.broadcast %22 : vector<1x128xf32> to vector<16x128xf32>
    %24 = arith.addf %21, %23 : vector<16x128xf32>
    %c0_18 = arith.constant 0 : index
    %c0_19 = arith.constant 0 : index
    %25 = vector.load %arg8[%c0_18, %c0_19] : memref<16x128xf32, #tpu.memory_space<vmem>>, vector<16x128xf32>
    tpu.vector_store %arg8[%c0_18, %c0_19], %24 {strides = array<i32>} : memref<16x128xf32, #tpu.memory_space<vmem>>, vector<16x128xf32>,
    return
  }
  func.func @transform_0(%arg0: i32) -> (i32, i32) {
    %c0_i32 = arith.constant 0 : i32
    %c0_i32_0 = arith.constant 0 : i32
    return %arg0, %c0_i32 : i32, i32
  }
  func.func @transform_1(%arg0: i32) -> (i32, i32) {
    %c0_i32 = arith.constant 0 : i32
    %c0_i32_0 = arith.constant 0 : i32
    %c0_i32_1 = arith.constant 0 : i32
    return %c0_i32, %c0_i32_0 : i32, i32
  }
  func.func @transform_2(%arg0: i32) -> (i32, i32) {
    %c0_i32 = arith.constant 0 : i32
    %c0_i32_0 = arith.constant 0 : i32
    %c0_i32_1 = arith.constant 0 : i32
    return %c0_i32, %c0_i32_0 : i32, i32
  }
  func.func @transform_3(%arg0: i32) -> (i32, i32) {
    %c0_i32 = arith.constant 0 : i32
    %c0_i32_0 = arith.constant 0 : i32
    %c0_i32_1 = arith.constant 0 : i32
    return %c0_i32, %c0_i32_0 : i32, i32
  }
  func.func @transform_4(%arg0: i32) -> (i32, i32) {
    %c0_i32 = arith.constant 0 : i32
    %c0_i32_0 = arith.constant 0 : i32
    %c0_i32_1 = arith.constant 0 : i32
    return %c0_i32, %c0_i32_0 : i32, i32
  }
  func.func @transform_5(%arg0: i32) -> (i32, i32) {
    %c0_i32 = arith.constant 0 : i32
    %c0_i32_0 = arith.constant 0 : i32
    %c0_i32_1 = arith.constant 0 : i32
    return %c0_i32, %c0_i32_0 : i32, i32
  }
  func.func @transform_6(%arg0: i32) -> (i32, i32) {
    %c0_i32 = arith.constant 0 : i32
    %c0_i32_0 = arith.constant 0 : i32
    %c0_i32_1 = arith.constant 0 : i32
    return %c0_i32, %c0_i32_0 : i32, i32
  }
  func.func @transform_7(%arg0: i32) -> (i32, i32) {
    %c0_i32 = arith.constant 0 : i32
    %c0_i32_0 = arith.constant 0 : i32
    return %arg0, %c0_i32 : i32, i32
  }
}

</mosaic_0001>

<llo_original>
// kernel: feedforward.1
$region0: #{feedforward.1}
  #allocation0 [shape = 'u32[]', space=smem, size = 0x4, offset = 0x4, fixed_abs, tag = 'smem constant byte address 0x4 - core index']
  #allocation1 [shape = 'u32[144,128]{1,0:T(1,128)}', space=vmem, size = 0x12000, scoped, tag = 'internal scratch']
  %s0 = inlined_call_operand.vmem [shape: f32[16,32], index: 0, kind: input, shape index: {}]
  %s1 = inlined_call_operand.vmem [shape: f32[32,128], index: 1, kind: input, shape index: {}]
  %s2 = inlined_call_operand.vmem [shape: f32[1,128], index: 2, kind: input, shape index: {}]
  %s3 = inlined_call_operand.vmem [shape: f32[32,128], index: 3, kind: input, shape index: {}]
  %s4 = inlined_call_operand.vmem [shape: f32[1,128], index: 4, kind: input, shape index: {}]
  %s5 = inlined_call_operand.vmem [shape: f32[128,128], index: 5, kind: input, shape index: {}]
  %s6 = inlined_call_operand.vmem [shape: f32[1,128], index: 6, kind: input, shape index: {}]
  %s7 = inlined_call_operand.vmem [shape: f32[16,128], index: 7, kind: output, shape index: {}]
  %s8 = sld [smem:[#allocation0]]
  $region38: #{feedforward.1} parent=0
    _
  %s10 = ssub.s32 1, %s8
  %s11 = scalar_select 0, %s10, %s8
  // Predicated region
  $region2: #{feedforward.1} parent=0 // pred_check
    _
  $region3: #{feedforward.1} parent=0 // pred_check_branch
    %13 = sbr.rel (0) target = $region5
  $region4: #{feedforward.1} parent=0 // pred_region
    _
  $region5: #{feedforward.1} parent=0 // pred_fallthru
    _
  // Predicated region
  $region6: #{feedforward.1} parent=0 // pred_check
    _
  $region7: #{feedforward.1} parent=0 // pred_check_branch
    %15 = sbr.rel (0) target = $region9
  $region8: #{feedforward.1} parent=0 // pred_region
    _
  $region9: #{feedforward.1} parent=0 // pred_fallthru
    _
  // Predicated region
  $region10: #{feedforward.1} parent=0 // pred_check
    _
  $region11: #{feedforward.1} parent=0 // pred_check_branch
    %17 = sbr.rel (0) target = $region13
  $region12: #{feedforward.1} parent=0 // pred_region
    _
  $region13: #{feedforward.1} parent=0 // pred_fallthru
    _
  // Predicated region
  $region14: #{feedforward.1} parent=0 // pred_check
    _
  $region15: #{feedforward.1} parent=0 // pred_check_branch
    %19 = sbr.rel (0) target = $region17
  $region16: #{feedforward.1} parent=0 // pred_region
    _
  $region17: #{feedforward.1} parent=0 // pred_fallthru
    _
  // Predicated region
  $region18: #{feedforward.1} parent=0 // pred_check
    _
  $region19: #{feedforward.1} parent=0 // pred_check_branch
    %21 = sbr.rel (0) target = $region21
  $region20: #{feedforward.1} parent=0 // pred_region
    _
  $region21: #{feedforward.1} parent=0 // pred_fallthru
    _
  // Predicated region
  $region22: #{feedforward.1} parent=0 // pred_check
    _
  $region23: #{feedforward.1} parent=0 // pred_check_branch
    %23 = sbr.rel (0) target = $region25
  $region24: #{feedforward.1} parent=0 // pred_region
    _
  $region25: #{feedforward.1} parent=0 // pred_fallthru
    _
  // Predicated region
  $region26: #{feedforward.1} parent=0 // pred_check
    _
  $region27: #{feedforward.1} parent=0 // pred_check_branch
    %25 = sbr.rel (0) target = $region29
  $region28: #{feedforward.1} parent=0 // pred_region
    _
  $region29: #{feedforward.1} parent=0 // pred_fallthru
    _
  %v26 = vld [vmem:[%s0] sm:$0xff]
  %v27 = vld [vmem:[%s0 + $0x8] sm:$0xff]
  %v28 = vld [vmem:[%s1] sm:$0xff]
  %v29 = vld [vmem:[%s1 + $0x8] sm:$0xff]
  %v30 = vld [vmem:[%s1 + $0x10] sm:$0xff]
  %v31 = vld [vmem:[%s1 + $0x18] sm:$0xff]
  %v32 = vld [vmem:[%s2] sm:$0x1]
  %v34 = vlaneseq
  %v35 = vshrl.u32 %v34, 7
  %v36 = vsub.s32 0, %v35
  %v37 = vrot.slane %v32, %v36
  %vm39 = vcmask 261120
  %v41 = vsel %vm39, %v26, 0
  %v44 = vsel %vm39, %v27, 0
  %46 = vmatprep.subr.mxu0 0.0
  %47 = vmatpush1.msra.mxu0 %v28
  %48 = vmatprep.subr.mxu0 0.0
  %49 = vmatpush1.msra.mxu0 %v29
  %50 = vmatprep.subr.mxu0 0.0
  %51 = vmatpush1.msra.mxu0 %v30
  %52 = vmatprep.subr.mxu0 0.0
  %53 = vmatpush1.msra.mxu0 %v31
  %54 = vmatprep.subr.mxu0 0.0
  %55 = vmatpush1.msra.mxu0 0.0
  %56 = vmatprep.subr.mxu0 0.0
  %57 = vmatpush1.msra.mxu0 0.0
  %58 = vmatprep.subr.mxu0 0.0
  %59 = vmatpush1.msra.mxu0 0.0
  %60 = vmatprep.subr.mxu0 0.0
  %61 = vmatpush1.msra.mxu0 0.0
  %62 = vmatprep.subr.mxu0 0.0
  %63 = vmatpush1.msra.mxu0 0.0
  %64 = vmatprep.subr.mxu0 0.0
  %65 = vmatpush1.msra.mxu0 0.0
  %66 = vmatprep.subr.mxu0 0.0
  %67 = vmatpush1.msra.mxu0 0.0
  %68 = vmatprep.subr.mxu0 0.0
  %69 = vmatpush1.msra.mxu0 0.0
  %70 = vmatprep.subr.mxu0 0.0
  %71 = vmatpush1.msra.mxu0 0.0
  %72 = vmatprep.subr.mxu0 0.0
  %73 = vmatpush1.msra.mxu0 0.0
  %74 = vmatprep.subr.mxu0 0.0
  %75 = vmatpush1.msra.mxu0 0.0
  %76 = vmatprep.subr.mxu0 0.0
  %77 = vmatpush1.msra.mxu0 0.0
  %78 = vmatprep.subr.mxu0 0.0
  %79 = vmatpush1.msra.mxu0 0.0
  %80 = vmatprep.subr.mxu0 0.0
  %81 = vmatpush1.msra.mxu0 0.0
  %82 = vmatprep.subr.mxu0 0.0
  %83 = vmatpush1.msra.mxu0 0.0
  %84 = vmatprep.subr.mxu0 0.0
  %85 = vmatpush1.msra.mxu0 0.0
  %86 = vmatprep.subr.mxu0 0.0
  %87 = vmatpush1.msra.mxu0 0.0
  %88 = vmatprep.subr.mxu0 0.0
  %89 = vmatpush1.msra.mxu0 0.0
  %90 = vmatprep.subr.mxu0 0.0
  %91 = vmatpush1.msra.mxu0 0.0
  %92 = vmatprep.subr.mxu0 0.0
  %93 = vmatpush1.msra.mxu0 0.0
  %94 = vmatprep.subr.mxu0 0.0
  %95 = vmatpush1.msra.mxu0 0.0
  %96 = vmatprep.subr.mxu0 0.0
  %97 = vmatpush1.msra.mxu0 0.0
  %98 = vmatprep.subr.mxu0 0.0
  %99 = vmatpush1.msra.mxu0 0.0
  %100 = vmatprep.subr.mxu0 0.0
  %101 = vmatpush1.msra.mxu0 0.0
  %102 = vmatprep.subr.mxu0 0.0
  %103 = vmatpush1.msra.mxu0 0.0
  %104 = vmatprep.subr.mxu0 0.0
  %105 = vmatpush1.msra.mxu0 0.0
  %106 = vmatprep.subr.mxu0 0.0
  %107 = vmatpush1.msra.mxu0 0.0
  %108 = vmatprep.subr.mxu0 0.0
  %109 = vmatpush1.msra.mxu0 0.0
  %110 = vmatprep.mubr.f32.mxu0 0.0
  %111 = vmatmul.mubr.f32.gmra.mrb[0].mxu0 %v41
  %v112 = vpop.f32.mrb[0].mxu0
  %v113 = vadd.f32 %v37, %v112
  %v114 = vpop.f32.mrb[0].mxu0
  %115 = vmatprep.mubr.f32.mxu0 0.0
  %116 = vmatmul.mubr.f32.gmra.mrb[0].mxu0 %v44
  %v117 = vpop.f32.mrb[0].mxu0
  %v118 = vadd.f32 %v37, %v117
  %v119 = vpop.f32.mrb[0].mxu0
  %120 = vdwg.mxu0
  %v121 = vld [vmem:[%s3] sm:$0xff]
  %v122 = vld [vmem:[%s3 + $0x8] sm:$0xff]
  %v123 = vld [vmem:[%s3 + $0x10] sm:$0xff]
  %v124 = vld [vmem:[%s3 + $0x18] sm:$0xff]
  %v125 = vld [vmem:[%s4] sm:$0x1]
  %v127 = vlaneseq
  %v128 = vshrl.u32 %v127, 7
  %v129 = vsub.s32 0, %v128
  %v130 = vrot.slane %v125, %v129
  %132 = vmatprep.subr.mxu0 0.0
  %133 = vmatpush1.msra.mxu0 %v121
  %134 = vmatprep.subr.mxu0 0.0
  %135 = vmatpush1.msra.mxu0 %v122
  %136 = vmatprep.subr.mxu0 0.0
  %137 = vmatpush1.msra.mxu0 %v123
  %138 = vmatprep.subr.mxu0 0.0
  %139 = vmatpush1.msra.mxu0 %v124
  %140 = vmatprep.subr.mxu0 0.0
  %141 = vmatpush1.msra.mxu0 0.0
  %142 = vmatprep.subr.mxu0 0.0
  %143 = vmatpush1.msra.mxu0 0.0
  %144 = vmatprep.subr.mxu0 0.0
  %145 = vmatpush1.msra.mxu0 0.0
  %146 = vmatprep.subr.mxu0 0.0
  %147 = vmatpush1.msra.mxu0 0.0
  %148 = vmatprep.subr.mxu0 0.0
  %149 = vmatpush1.msra.mxu0 0.0
  %150 = vmatprep.subr.mxu0 0.0
  %151 = vmatpush1.msra.mxu0 0.0
  %152 = vmatprep.subr.mxu0 0.0
  %153 = vmatpush1.msra.mxu0 0.0
  %154 = vmatprep.subr.mxu0 0.0
  %155 = vmatpush1.msra.mxu0 0.0
  %156 = vmatprep.subr.mxu0 0.0
  %157 = vmatpush1.msra.mxu0 0.0
  %158 = vmatprep.subr.mxu0 0.0
  %159 = vmatpush1.msra.mxu0 0.0
  %160 = vmatprep.subr.mxu0 0.0
  %161 = vmatpush1.msra.mxu0 0.0
  %162 = vmatprep.subr.mxu0 0.0
  %163 = vmatpush1.msra.mxu0 0.0
  %164 = vmatprep.subr.mxu0 0.0
  %165 = vmatpush1.msra.mxu0 0.0
  %166 = vmatprep.subr.mxu0 0.0
  %167 = vmatpush1.msra.mxu0 0.0
  %168 = vmatprep.subr.mxu0 0.0
  %169 = vmatpush1.msra.mxu0 0.0
  %170 = vmatprep.subr.mxu0 0.0
  %171 = vmatpush1.msra.mxu0 0.0
  %172 = vmatprep.subr.mxu0 0.0
  %173 = vmatpush1.msra.mxu0 0.0
  %174 = vmatprep.subr.mxu0 0.0
  %175 = vmatpush1.msra.mxu0 0.0
  %176 = vmatprep.subr.mxu0 0.0
  %177 = vmatpush1.msra.mxu0 0.0
  %178 = vmatprep.subr.mxu0 0.0
  %179 = vmatpush1.msra.mxu0 0.0
  %180 = vmatprep.subr.mxu0 0.0
  %181 = vmatpush1.msra.mxu0 0.0
  %182 = vmatprep.subr.mxu0 0.0
  %183 = vmatpush1.msra.mxu0 0.0
  %184 = vmatprep.subr.mxu0 0.0
  %185 = vmatpush1.msra.mxu0 0.0
  %186 = vmatprep.subr.mxu0 0.0
  %187 = vmatpush1.msra.mxu0 0.0
  %188 = vmatprep.subr.mxu0 0.0
  %189 = vmatpush1.msra.mxu0 0.0
  %190 = vmatprep.subr.mxu0 0.0
  %191 = vmatpush1.msra.mxu0 0.0
  %192 = vmatprep.subr.mxu0 0.0
  %193 = vmatpush1.msra.mxu0 0.0
  %194 = vmatprep.subr.mxu0 0.0
  %195 = vmatpush1.msra.mxu0 0.0
  %196 = vmatprep.mubr.f32.mxu0 0.0
  %197 = vmatmul.mubr.f32.gmra.mrb[0].mxu0 %v41
  %v198 = vpop.f32.mrb[0].mxu0
  %v199 = vadd.f32 %v130, %v198
  %v200 = vpop.f32.mrb[0].mxu0
  %201 = vmatprep.mubr.f32.mxu0 0.0
  %202 = vmatmul.mubr.f32.gmra.mrb[0].mxu0 %v44
  %v203 = vpop.f32.mrb[0].mxu0
  %v204 = vadd.f32 %v130, %v203
  %v205 = vpop.f32.mrb[0].mxu0
  %206 = vdwg.mxu0
  %v207 = vmul.f32 %v199, 0.5
  %v208 = vmul.f32 %v204, 0.5
  %v209 = vmul.f32 %v199, 0.70710677
  %v210 = vmul.f32 %v204, 0.70710677
  %v211 = verf.f32.pop %v209
  %v212 = verf.f32.pop %v210
  %v213 = vadd.f32 %v211, 1.0
  %v214 = vadd.f32 %v212, 1.0
  %v215 = vmul.f32 %v207, %v213
  %v216 = vmul.f32 %v208, %v214
  %v217 = vmul.f32 %v113, %v215
  %v218 = vmul.f32 %v118, %v216
  %v219 = vld [vmem:[%s5] sm:$0xff]
  %v220 = vld [vmem:[%s5 + $0x8] sm:$0xff]
  %v221 = vld [vmem:[%s5 + $0x10] sm:$0xff]
  %v222 = vld [vmem:[%s5 + $0x18] sm:$0xff]
  %v223 = vld [vmem:[%s5 + $0x20] sm:$0xff]
  %v224 = vld [vmem:[%s5 + $0x28] sm:$0xff]
  %v225 = vld [vmem:[%s5 + $0x30] sm:$0xff]
  %v226 = vld [vmem:[%s5 + $0x38] sm:$0xff]
  %v227 = vld [vmem:[%s5 + $0x40] sm:$0xff]
  %v228 = vld [vmem:[%s5 + $0x48] sm:$0xff]
  %v229 = vld [vmem:[%s5 + $0x50] sm:$0xff]
  %v230 = vld [vmem:[%s5 + $0x58] sm:$0xff]
  %v231 = vld [vmem:[%s5 + $0x60] sm:$0xff]
  %v232 = vld [vmem:[%s5 + $0x68] sm:$0xff]
  %v233 = vld [vmem:[%s5 + $0x70] sm:$0xff]
  %v234 = vld [vmem:[%s5 + $0x78] sm:$0xff]
  %v235 = vld [vmem:[%s6] sm:$0x1]
  %v237 = vlaneseq
  %v238 = vshrl.u32 %v237, 7
  %v239 = vsub.s32 0, %v238
  %v240 = vrot.slane %v235, %v239
  %242 = vmatprep.subr.mxu0 0.0
  %243 = vmatpush1.msra.mxu0 %v219
  %244 = vmatprep.subr.mxu0 0.0
  %245 = vmatpush1.msra.mxu0 %v220
  %246 = vmatprep.subr.mxu0 0.0
  %247 = vmatpush1.msra.mxu0 %v221
  %248 = vmatprep.subr.mxu0 0.0
  %249 = vmatpush1.msra.mxu0 %v222
  %250 = vmatprep.subr.mxu0 0.0
  %251 = vmatpush1.msra.mxu0 %v223
  %252 = vmatprep.subr.mxu0 0.0
  %253 = vmatpush1.msra.mxu0 %v224
  %254 = vmatprep.subr.mxu0 0.0
  %255 = vmatpush1.msra.mxu0 %v225
  %256 = vmatprep.subr.mxu0 0.0
  %257 = vmatpush1.msra.mxu0 %v226
  %258 = vmatprep.subr.mxu0 0.0
  %259 = vmatpush1.msra.mxu0 %v227
  %260 = vmatprep.subr.mxu0 0.0
  %261 = vmatpush1.msra.mxu0 %v228
  %262 = vmatprep.subr.mxu0 0.0
  %263 = vmatpush1.msra.mxu0 %v229
  %264 = vmatprep.subr.mxu0 0.0
  %265 = vmatpush1.msra.mxu0 %v230
  %266 = vmatprep.subr.mxu0 0.0
  %267 = vmatpush1.msra.mxu0 %v231
  %268 = vmatprep.subr.mxu0 0.0
  %269 = vmatpush1.msra.mxu0 %v232
  %270 = vmatprep.subr.mxu0 0.0
  %271 = vmatpush1.msra.mxu0 %v233
  %272 = vmatprep.subr.mxu0 0.0
  %273 = vmatpush1.msra.mxu0 %v234
  %274 = vmatprep.subr.mxu0 0.0
  %275 = vmatpush1.msra.mxu0 0.0
  %276 = vmatprep.subr.mxu0 0.0
  %277 = vmatpush1.msra.mxu0 0.0
  %278 = vmatprep.subr.mxu0 0.0
  %279 = vmatpush1.msra.mxu0 0.0
  %280 = vmatprep.subr.mxu0 0.0
  %281 = vmatpush1.msra.mxu0 0.0
  %282 = vmatprep.subr.mxu0 0.0
  %283 = vmatpush1.msra.mxu0 0.0
  %284 = vmatprep.subr.mxu0 0.0
  %285 = vmatpush1.msra.mxu0 0.0
  %286 = vmatprep.subr.mxu0 0.0
  %287 = vmatpush1.msra.mxu0 0.0
  %288 = vmatprep.subr.mxu0 0.0
  %289 = vmatpush1.msra.mxu0 0.0
  %290 = vmatprep.subr.mxu0 0.0
  %291 = vmatpush1.msra.mxu0 0.0
  %292 = vmatprep.subr.mxu0 0.0
  %293 = vmatpush1.msra.mxu0 0.0
  %294 = vmatprep.subr.mxu0 0.0
  %295 = vmatpush1.msra.mxu0 0.0
  %296 = vmatprep.subr.mxu0 0.0
  %297 = vmatpush1.msra.mxu0 0.0
  %298 = vmatprep.subr.mxu0 0.0
  %299 = vmatpush1.msra.mxu0 0.0
  %300 = vmatprep.subr.mxu0 0.0
  %301 = vmatpush1.msra.mxu0 0.0
  %302 = vmatprep.subr.mxu0 0.0
  %303 = vmatpush1.msra.mxu0 0.0
  %304 = vmatprep.subr.mxu0 0.0
  %305 = vmatpush1.msra.mxu0 0.0
  %306 = vmatprep.mubr.f32.mxu0 0.0
  %307 = vmatmul.mubr.f32.gmra.mrb[0].mxu0 %v217
  %v308 = vpop.f32.mrb[0].mxu0
  %v309 = vadd.f32 %v240, %v308
  %v310 = vpop.f32.mrb[0].mxu0
  %311 = vmatprep.mubr.f32.mxu0 0.0
  %312 = vmatmul.mubr.f32.gmra.mrb[0].mxu0 %v218
  %v313 = vpop.f32.mrb[0].mxu0
  %v314 = vadd.f32 %v240, %v313
  %v315 = vpop.f32.mrb[0].mxu0
  %316 = vdwg.mxu0
  %317 = vst [vmem:[%s7] sm:$0xff] %v309
  %318 = vst [vmem:[%s7 + $0x8] sm:$0xff] %v314
  // Predicated region
  $region30: #{feedforward.1} parent=0 // pred_check
    _
  $region31: #{feedforward.1} parent=0 // pred_check_branch
    %320 = sbr.rel (0) target = $region33
  $region32: #{feedforward.1} parent=0 // pred_region
    _
  $region33: #{feedforward.1} parent=0 // pred_fallthru
    _
  // Predicated region
  $region34: #{feedforward.1} parent=0 // pred_check
    _
  $region35: #{feedforward.1} parent=0 // pred_check_branch
    %322 = sbr.rel (0) target = $region37
  $region36: #{feedforward.1} parent=0 // pred_region
    _
  $region37: #{feedforward.1} parent=0 // pred_fallthru
    _

</llo_original>
